<compile_context>
chip_gen: v7x
topology: tpu7x:2x2x1
jax: 0.10.0
libtpu: 0.0.40
codegen_flags: <defaults>
</compile_context>

<pallas_src>
import functools

import jax
import jax.numpy as jnp
from jax.experimental import pallas as pl
from jax.experimental.pallas import tpu as pltpu

THRESH = 0.5       # module-level `thresh` used by BatchNorm3d1.reset_parameters
EPS = 1e-5


# --------------------------------------------------------------------------- #
# budget / tiling helpers
# --------------------------------------------------------------------------- #
def _vmem_budget_bytes():
    """Scoped-VMEM budget derived from the chip generation.

    v5e/v6e: 128 MiB physical -> ~83 MiB scoped; v7x: 64 MiB -> ~42 MiB.
    """
    phys = 64 * 1024 * 1024
    try:
        info = pltpu.get_tpu_info()
        p = getattr(info, "vmem_capacity_bytes", None)
        if p:
            phys = int(p)
    except Exception:
        pass
    return max(32 * 1024 * 1024, min(int(phys * 0.65), 100 * 1024 * 1024))


def _largest_divisor_leq(n, cap):
    cap = max(1, min(cap, n))
    for d in range(cap, 0, -1):
        if n % d == 0:
            return d
    return 1


def _pick_c_blk(c, cap=256):
    # Channel tile (sublane axis): a multiple of 8 dividing C, or the full C
    # dimension.  A full-dim block is legal even when C % 8 != 0, so the data
    # is never padded/copied.
    if c % 8 != 0 or c <= cap:
        return c
    d = cap - cap % 8
    while d >= 8:
        if c % d == 0:
            return d
        d -= 8
    return c


def _pick_lane_blk(n, cap):
    # Lane-axis tile: a multiple of 128 dividing n, or the full dimension
    # (keeps the DMA contiguous when n is not 128-aligned).
    if n % 128 != 0 or n <= cap:
        return n
    d = max(128, cap - cap % 128)
    while d >= 128:
        if n % d == 0:
            return d
        d -= 128
    return n


# --------------------------------------------------------------------------- #
# kernels
# --------------------------------------------------------------------------- #
def _stats_kernel(x_ref, sum_ref, sq_ref):
    # x_ref: (b_blk, c_blk, hw_blk).  Per-channel partial sum / sum-of-squares,
    # accumulated over the hw grid axis (last, "arbitrary").
    @pl.when(pl.program_id(2) == 0)
    def _():
        sum_ref[...] = jnp.zeros_like(sum_ref)
        sq_ref[...] = jnp.zeros_like(sq_ref)

    x = x_ref[...].astype(jnp.float32)
    xs = jnp.sum(x, axis=0, keepdims=True)                 # VALU vreg adds first
    qs = jnp.sum(x * x, axis=0, keepdims=True)
    sum_ref[...] += jnp.sum(xs, axis=2, keepdims=True)     # then one XLU lane reduce
    sq_ref[...] += jnp.sum(qs, axis=2, keepdims=True)


def _norm_kernel(x_ref, s_ref, t_ref, o_ref):
    # y = x * s[c] + t[c]; s/t are (c_blk, 1), resident across b / hw.
    x = x_ref[...].astype(jnp.float32)
    o_ref[...] = (x * s_ref[...][None] + t_ref[...][None]).astype(o_ref.dtype)


def _norm_flat_kernel(x_ref, s_ref, t_ref, o_ref):
    # Lane-dense variant on a flattened (B, C*HW) view: s/t are pre-expanded
    # (1, chw_blk) slabs so output stores are unmasked full-lane vst.
    x = x_ref[...].astype(jnp.float32)
    o_ref[...] = (x * s_ref[...] + t_ref[...]).astype(o_ref.dtype)


def _fused_kernel(x_ref, g_ref, b_ref, o_ref, *, count, eps):
    # Single-pass path (tensor fits in VMEM): stats + finalize + normalize.
    x = x_ref[...].astype(jnp.float32)                     # (B, C, HW)
    xs = jnp.sum(x, axis=0)                                # (C, HW)  vreg adds
    qs = jnp.sum(x * x, axis=0)
    sum_x = jnp.sum(xs, axis=1, keepdims=True)             # (C, 1)   lane reduce
    sum_sq = jnp.sum(qs, axis=1, keepdims=True)
    inv_n = 1.0 / count
    mean = sum_x * inv_n
    var = jnp.maximum(sum_sq * inv_n - mean * mean, 0.0)   # biased, clamped
    inv = jax.lax.rsqrt(var + eps)
    s = g_ref[...] * inv
    t = b_ref[...] - mean * s
    o_ref[...] = (x * s[None] + t[None]).astype(o_ref.dtype)


# --------------------------------------------------------------------------- #
# forward
# --------------------------------------------------------------------------- #
def tdbn_forward(x, gamma, beta, eps=EPS, *, donate_input=False,
                 force_two_pass=False):
    """TDBN forward.  x: (T, N, C, H, W); gamma/beta: (C,)."""
    T, N, C, H, W = x.shape
    B, HW = T * N, H * W
    m_count = float(B * HW)                   # per-channel element count
    itemsize = jnp.dtype(x.dtype).itemsize
    total_elems = B * C * HW

    x3 = x.reshape(B, C, HW)                  # free contiguous view
    gamma_f = gamma.astype(jnp.float32)
    beta_f = beta.astype(jnp.float32)

    vmem_limit = _vmem_budget_bytes()
    # f32-elem budget per tile buffer (sweep 2 holds ~4 double-buffered tiles).
    tile_target_elems = max(128 * 128, (vmem_limit // 8) // 4)

    alias = {0: 0} if donate_input else {}

    # ---- small-tensor fused path: one HBM read + one HBM write -------------
    if not force_two_pass and 6 * total_elems * 4 <= vmem_limit:
        full_x_spec = pl.BlockSpec((B, C, HW), lambda i: (0, 0, 0))
        full_c_spec = pl.BlockSpec((C, 1), lambda i: (0, 0))
        out3 = pl.pallas_call(
            functools.partial(_fused_kernel, count=m_count, eps=eps),
            out_shape=jax.ShapeDtypeStruct((B, C, HW), x.dtype),
            grid_spec=pltpu.PrefetchScalarGridSpec(
                num_scalar_prefetch=0, grid=(1,),
                in_specs=[full_x_spec, full_c_spec, full_c_spec],
                out_specs=full_x_spec),
            compiler_params=pltpu.CompilerParams(
                dimension_semantics=("arbitrary",),
                vmem_limit_bytes=vmem_limit),
            cost_estimate=pl.CostEstimate(
                flops=5 * total_elems, transcendentals=C,
                bytes_accessed=2 * total_elems * itemsize),
            input_output_aliases=alias,
        )(x3, gamma_f.reshape(C, 1), beta_f.reshape(C, 1))
        return out3.reshape(T, N, C, H, W)

    # ---- tile selection (two-pass path) -------------------------------------
    c_blk = _pick_c_blk(C)
    hw_cap = max(128, (tile_target_elems // max(c_blk, 1)) // 128 * 128)
    hw_blk = _pick_lane_blk(HW, hw_cap)
    b_blk = _largest_divisor_leq(B, max(1, tile_target_elems // (c_blk * hw_blk)))
    n_b, n_c = B // b_blk, C // c_blk

    # Keep >= 2 parallel (b, c) blocks so v7x's second TensorCore has work
    # during the stats sweep (the hw axis is the serial accumulator axis).
    if n_b * n_c == 1:
        if B > 1:
            b_blk = _largest_divisor_leq(B, max(1, B // 2))
        elif c_blk % 16 == 0:
            c_blk = c_blk // 2
        n_b, n_c = B // b_blk, C // c_blk

    n_hw = HW // hw_blk
    grid = (n_b, n_c, n_hw)
    x_spec = pl.BlockSpec((b_blk, c_blk, hw_blk), lambda b, c, h: (b, c, h))

    # ---- sweep 1: per-channel partial sum / sum-of-squares ------------------
    stat_spec = pl.BlockSpec((1, c_blk, 1), lambda b, c, h: (b, c, 0))
    psum, psq = pl.pallas_call(
        _stats_kernel,
        out_shape=(jax.ShapeDtypeStruct((n_b, C, 1), jnp.float32),
                   jax.ShapeDtypeStruct((n_b, C, 1), jnp.float32)),
        grid_spec=pltpu.PrefetchScalarGridSpec(
            num_scalar_prefetch=0, grid=grid,
            in_specs=[x_spec],
            out_specs=[stat_spec, stat_spec]),
        compiler_params=pltpu.CompilerParams(
            dimension_semantics=("parallel", "parallel", "arbitrary"),
            vmem_limit_bytes=vmem_limit),
        cost_estimate=pl.CostEstimate(
            flops=3 * total_elems, transcendentals=0,
            bytes_accessed=total_elems * itemsize),
    )(x3)

    # ---- tiny finalize: fold gamma/beta/mean/rsqrt into per-channel s, t ----
    sum_x = jnp.sum(psum[:, :, 0], axis=0)
    sum_sq = jnp.sum(psq[:, :, 0], axis=0)
    mean = sum_x / m_count
    var = jnp.maximum(sum_sq / m_count - mean * mean, 0.0)   # biased, clamped
    inv = jax.lax.rsqrt(var + eps)
    s = gamma_f * inv
    t = beta_f - mean * s

    # ---- sweep 2: y = x * s + t ---------------------------------------------
    CHW = C * HW
    if HW % 128 != 0 and CHW % 128 == 0:
        # Lane-dense path for non-128-aligned spatial sizes (49/196/784/...):
        # flatten to (B, C*HW) so output stores are unmasked full-lane vst.
        x2 = x3.reshape(B, CHW)
        s_slab = jnp.broadcast_to(s[:, None], (C, HW)).reshape(1, CHW)
        t_slab = jnp.broadcast_to(t[:, None], (C, HW)).reshape(1, CHW)
        chw_blk = _pick_lane_blk(CHW, max(128, tile_target_elems // 128 * 128))
        b_blk2 = _largest_divisor_leq(B, max(1, tile_target_elems // chw_blk))
        grid2 = (B // b_blk2, CHW // chw_blk)
        x2_spec = pl.BlockSpec((b_blk2, chw_blk), lambda b, j: (b, j))
        slab_spec = pl.BlockSpec((1, chw_blk), lambda b, j: (0, j))
        out2 = pl.pallas_call(
            _norm_flat_kernel,
            out_shape=jax.ShapeDtypeStruct((B, CHW), x.dtype),
            grid_spec=pltpu.PrefetchScalarGridSpec(
                num_scalar_prefetch=0, grid=grid2,
                in_specs=[x2_spec, slab_spec, slab_spec],
                out_specs=x2_spec),
            compiler_params=pltpu.CompilerParams(
                dimension_semantics=("parallel", "parallel"),
                vmem_limit_bytes=vmem_limit),
            cost_estimate=pl.CostEstimate(
                flops=2 * total_elems, transcendentals=0,
                bytes_accessed=2 * total_elems * itemsize),
            input_output_aliases=alias,
        )(x2, s_slab, t_slab)
        return out2.reshape(T, N, C, H, W)

    st_spec = pl.BlockSpec((c_blk, 1), lambda b, c, h: (c, 0))
    out3 = pl.pallas_call(
        _norm_kernel,
        out_shape=jax.ShapeDtypeStruct((B, C, HW), x.dtype),
        grid_spec=pltpu.PrefetchScalarGridSpec(
            num_scalar_prefetch=0, grid=grid,
            in_specs=[x_spec, st_spec, st_spec],
            out_specs=x_spec),
        compiler_params=pltpu.CompilerParams(
            dimension_semantics=("parallel", "parallel", "parallel"),
            vmem_limit_bytes=vmem_limit),
        cost_estimate=pl.CostEstimate(
            flops=2 * total_elems, transcendentals=0,
            bytes_accessed=2 * total_elems * itemsize),
        input_output_aliases=alias,
    )(x3, s.reshape(C, 1), t.reshape(C, 1))
    return out3.reshape(T, N, C, H, W)           # free contiguous reshape


def batch_norm_2d_forward(x, eps=EPS):
    """batch_norm_2d (TDBN): gamma = thresh, beta = 0."""
    C = x.shape[2]
    return tdbn_forward(x, jnp.full((C,), THRESH, jnp.float32),
                        jnp.zeros((C,), jnp.float32), eps)


def batch_norm_2d1_forward(x, eps=EPS):
    """batch_norm_2d1 (TDBN zero-init): gamma = 0, beta = 0."""
    C = x.shape[2]
    return tdbn_forward(x, jnp.zeros((C,), jnp.float32),
                        jnp.zeros((C,), jnp.float32), eps)


def _reference(x, gamma, beta, eps=EPS):
    # pure-JAX reference of training-mode BatchNorm over channel axis 2.
    axes = (0, 1, 3, 4)
    mean = jnp.mean(x, axis=axes, keepdims=True)
    var = jnp.mean((x - mean) ** 2, axis=axes, keepdims=True)
    g = gamma.reshape(1, 1, -1, 1, 1)
    b = beta.reshape(1, 1, -1, 1, 1)
    return (x - mean) / jnp.sqrt(var + eps) * g + b


if __name__ == "__main__":
    key = jax.random.PRNGKey(0)
    k1, k2, k3 = jax.random.split(key, 3)

    # Case 1: small shape -> fused single-pass path (both BN variants used in
    # BasicBlock_104), then the same data through the two-pass tiled path.
    T, N, C, H, W = 4, 2, 16, 16, 16
    x = jax.random.normal(k1, (T, N, C, H, W), dtype=jnp.float32) * 1.7 + 0.3
    gamma = jnp.full((C,), THRESH, dtype=jnp.float32)
    beta = jnp.zeros((C,), dtype=jnp.float32)

    y = jax.block_until_ready(tdbn_forward(x, gamma, beta))
    assert y.shape == x.shape
    assert jnp.allclose(y, _reference(x, gamma, beta), atol=1e-4, rtol=1e-4)

    y0 = jax.block_until_ready(batch_norm_2d1_forward(x))
    assert jnp.allclose(y0, _reference(x, jnp.zeros((C,), jnp.float32), beta),
                        atol=1e-4, rtol=1e-4)

    y_tp = jax.block_until_ready(tdbn_forward(x, gamma, beta,
                                              force_two_pass=True))
    assert jnp.allclose(y_tp, _reference(x, gamma, beta), atol=1e-4, rtol=1e-4)

    # Case 2: channel count not sublane-aligned -> full-C blocks, no padding
    # copies (exercises the two-pass path with C % 8 != 0).
    T2, N2, C2, H2, W2 = 2, 2, 4, 16, 16
    x2 = jax.random.normal(k2, (T2, N2, C2, H2, W2), dtype=jnp.float32)
    g2 = jnp.full((C2,), THRESH, dtype=jnp.float32)
    b2 = jnp.zeros((C2,), dtype=jnp.float32)
    y2 = jax.block_until_ready(tdbn_forward(x2, g2, b2, force_two_pass=True))
    assert jnp.allclose(y2, _reference(x2, g2, b2), atol=1e-4, rtol=1e-4)

    # Case 3: ResNet-style non-128-aligned H*W (14x14) -> lane-dense flattened
    # sweep-2 path (C*HW % 128 == 0).
    T3, N3, C3, H3, W3 = 2, 2, 32, 14, 14
    x3 = jax.random.normal(k3, (T3, N3, C3, H3, W3), dtype=jnp.float32) * 0.9 - 0.2
    g3 = jnp.full((C3,), THRESH, dtype=jnp.float32)
    b3 = jnp.zeros((C3,), dtype=jnp.float32)
    y3 = jax.block_until_ready(tdbn_forward(x3, g3, b3, force_two_pass=True))
    assert jnp.allclose(y3, _reference(x3, g3, b3), atol=1e-4, rtol=1e-4)

    print("KERNEL_OK")
</pallas_src>

<mosaic_0001>
module attributes {stable_mosaic.version = 11 : i64} {
  func.func @_fused_kernel(%arg0: i32, %arg1: memref<8x16x256xf32, #tpu.memory_space<vmem>>, %arg2: memref<16x1xf32, #tpu.memory_space<vmem>>, %arg3: memref<16x1xf32, #tpu.memory_space<vmem>>, %arg4: memref<8x16x256xf32, #tpu.memory_space<vmem>>) attributes {dimension_semantics = [#tpu.dimension_semantics<arbitrary>], iteration_bounds = array<i64: 1>, scalar_prefetch = 0 : i64, scratch_operands = 0 : i64, tpu.core_type = #tpu.core_type<tc>, window_params = [{pipeline_mode = #tpu.pipeline_mode<synchronous>, transform_indices = @transform_0, window_bounds = array<i64: 8, 16, 256>}, {pipeline_mode = #tpu.pipeline_mode<synchronous>, transform_indices = @transform_1, window_bounds = array<i64: 16, 1>}, {pipeline_mode = #tpu.pipeline_mode<synchronous>, transform_indices = @transform_2, window_bounds = array<i64: 16, 1>}, {pipeline_mode = #tpu.pipeline_mode<synchronous>, transform_indices = @transform_3, window_bounds = array<i64: 8, 16, 256>}]} {
    %c0 = arith.constant 0 : index
    %c0_0 = arith.constant 0 : index
    %c0_1 = arith.constant 0 : index
    %0 = vector.load %arg1[%c0, %c0_0, %c0_1] : memref<8x16x256xf32, #tpu.memory_space<vmem>>, vector<8x16x256xf32>
    %cst = arith.constant dense<0.000000e+00> : vector<16x256xf32>
    %1 = vector.multi_reduction <add>, %0, %cst [0] : vector<8x16x256xf32> to vector<16x256xf32>
    %2 = arith.mulf %0, %0 : vector<8x16x256xf32>
    %cst_2 = arith.constant dense<0.000000e+00> : vector<16x256xf32>
    %3 = vector.multi_reduction <add>, %2, %cst_2 [0] : vector<8x16x256xf32> to vector<16x256xf32>
    %cst_3 = arith.constant dense<0.000000e+00> : vector<16xf32>
    %4 = vector.multi_reduction <add>, %1, %cst_3 [1] : vector<16x256xf32> to vector<16xf32>
    %5 = vector.shape_cast %4 : vector<16xf32> to vector<16x1xf32>
    %cst_4 = arith.constant dense<0.000000e+00> : vector<16xf32>
    %6 = vector.multi_reduction <add>, %3, %cst_4 [1] : vector<16x256xf32> to vector<16xf32>
    %7 = vector.shape_cast %6 : vector<16xf32> to vector<16x1xf32>
    %cst_5 = arith.constant 4.8828125E-4 : f32
    %8 = vector.broadcast %cst_5 : f32 to vector<16x1xf32>
    %9 = arith.mulf %5, %8 : vector<16x1xf32>
    %cst_6 = arith.constant 4.8828125E-4 : f32
    %10 = vector.broadcast %cst_6 : f32 to vector<16x1xf32>
    %11 = arith.mulf %7, %10 : vector<16x1xf32>
    %12 = arith.mulf %9, %9 : vector<16x1xf32>
    %13 = arith.subf %11, %12 : vector<16x1xf32>
    %cst_7 = arith.constant 0.000000e+00 : f32
    %14 = vector.broadcast %cst_7 : f32 to vector<16x1xf32>
    %15 = arith.maximumf %13, %14 : vector<16x1xf32>
    %cst_8 = arith.constant 9.99999974E-6 : f32
    %16 = vector.broadcast %cst_8 : f32 to vector<16x1xf32>
    %17 = arith.addf %15, %16 : vector<16x1xf32>
    %18 = math.rsqrt %17 : vector<16x1xf32>
    %c0_9 = arith.constant 0 : index
    %c0_10 = arith.constant 0 : index
    %19 = vector.load %arg2[%c0_9, %c0_10] : memref<16x1xf32, #tpu.memory_space<vmem>>, vector<16x1xf32>
    %20 = arith.mulf %19, %18 : vector<16x1xf32>
    %c0_11 = arith.constant 0 : index
    %c0_12 = arith.constant 0 : index
    %21 = vector.load %arg3[%c0_11, %c0_12] : memref<16x1xf32, #tpu.memory_space<vmem>>, vector<16x1xf32>
    %22 = arith.mulf %9, %20 : vector<16x1xf32>
    %23 = arith.subf %21, %22 : vector<16x1xf32>
    %24 = vector.shape_cast %20 : vector<16x1xf32> to vector<1x16x1xf32>
    %25 = vector.broadcast %24 : vector<1x16x1xf32> to vector<8x16x256xf32>
    %26 = arith.mulf %0, %25 : vector<8x16x256xf32>
    %27 = vector.shape_cast %23 : vector<16x1xf32> to vector<1x16x1xf32>
    %28 = vector.broadcast %27 : vector<1x16x1xf32> to vector<8x16x256xf32>
    %29 = arith.addf %26, %28 : vector<8x16x256xf32>
    %c0_13 = arith.constant 0 : index
    %c0_14 = arith.constant 0 : index
    %c0_15 = arith.constant 0 : index
    %30 = vector.load %arg4[%c0_13, %c0_14, %c0_15] : memref<8x16x256xf32, #tpu.memory_space<vmem>>, vector<8x16x256xf32>
    tpu.vector_store %arg4[%c0_13, %c0_14, %c0_15], %29 {strides = array<i32>} : memref<8x16x256xf32, #tpu.memory_space<vmem>>, vector<8x16x256xf32>,
    return
  }
  func.func @transform_0(%arg0: i32) -> (i32, i32, i32) {
    %c0_i32 = arith.constant 0 : i32
    %c0_i32_0 = arith.constant 0 : i32
    %c0_i32_1 = arith.constant 0 : i32
    %c0_i32_2 = arith.constant 0 : i32
    return %c0_i32, %c0_i32_0, %c0_i32_1 : i32, i32, i32
  }
  func.func @transform_1(%arg0: i32) -> (i32, i32) {
    %c0_i32 = arith.constant 0 : i32
    %c0_i32_0 = arith.constant 0 : i32
    %c0_i32_1 = arith.constant 0 : i32
    return %c0_i32, %c0_i32_0 : i32, i32
  }
  func.func @transform_2(%arg0: i32) -> (i32, i32) {
    %c0_i32 = arith.constant 0 : i32
    %c0_i32_0 = arith.constant 0 : i32
    %c0_i32_1 = arith.constant 0 : i32
    return %c0_i32, %c0_i32_0 : i32, i32
  }
  func.func @transform_3(%arg0: i32) -> (i32, i32, i32) {
    %c0_i32 = arith.constant 0 : i32
    %c0_i32_0 = arith.constant 0 : i32
    %c0_i32_1 = arith.constant 0 : i32
    %c0_i32_2 = arith.constant 0 : i32
    return %c0_i32, %c0_i32_0, %c0_i32_1 : i32, i32, i32
  }
}

</mosaic_0001>

<llo_original>
// kernel: tpu_custom_call.1
$region0: #{tpu_custom_call.1}
  #allocation0 [shape = 'u32[]', space=smem, size = 0x4, offset = 0x4, fixed_abs, tag = 'smem constant byte address 0x4 - core index']
  #allocation1 [shape = 'u32[144,128]{1,0:T(1,128)}', space=vmem, size = 0x12000, scoped, tag = 'internal scratch']
  %s0 = inlined_call_operand.hbm [shape: f32[8,16,256], index: 0, kind: input, shape index: {}]
  %s1 = inlined_call_operand.vmem [shape: f32[16,1], index: 1, kind: input, shape index: {}]
  %s2 = inlined_call_operand.vmem [shape: f32[16,1], index: 2, kind: input, shape index: {}]
  %s3 = inlined_call_operand.hbm [shape: f32[8,16,256], index: 3, kind: output, shape index: {}]
  %s4 = sld [smem:[#allocation0]]
  $region26: #{tpu_custom_call.1} parent=0
    _
  %s6 = ssub.s32 1, %s4
  %s7 = scalar_select 0, %s6, %s4
  $region1: #{tpu_custom_call.1} parent=0
    #allocation2 [shape = 'u8[131072]{0}', space=vmem, size = 0x20000, scoped, tag = 'input window, operand 0, single buffered']
    #allocation3 [shape = 's32[1]{0}', space=sflag, size = 0x4, scoped, tag = 'scoped memory for tpu_custom_call.1']
    #allocation4 [shape = 's32[1]{0}', space=sflag, size = 0x4, scoped, tag = 'scoped memory for tpu_custom_call.1']
    #allocation5 [shape = 'u8[131072]{0}', space=vmem, size = 0x20000, scoped, tag = 'output window, operand 0, single buffered']
    %8 = vsyncpa [#allocation3], 0
    %9 = vsyncpa [#allocation4], 0
    // Predicated region
    $region2: #{tpu_custom_call.1} parent=1 // pred_check
      _
    $region3: #{tpu_custom_call.1} parent=1 // pred_check_branch
      %11 = sbr.rel (0) target = $region5
    $region4: #{tpu_custom_call.1} parent=1 // pred_region
      %s13 = ssub.s32 4096, 4096
      %14 = vsyncadd [#allocation3], %s13
      %s15 = sshll.u32 [#allocation2], 4
      %s16 = int_to_ptr.vmem [resolvable:$true] %s15
      %21 = dma.hbm_to_vmem [thread:$0]  %s0, 4096, %s16, [#allocation3], 256, 256, 16
    $region5: #{tpu_custom_call.1} parent=1 // pred_fallthru
      _
    // Predicated region
    $region6: #{tpu_custom_call.1} parent=1 // pred_check
      _
    $region7: #{tpu_custom_call.1} parent=1 // pred_check_branch
      %23 = sbr.rel (0) target = $region9
    $region8: #{tpu_custom_call.1} parent=1 // pred_region
      _
    $region9: #{tpu_custom_call.1} parent=1 // pred_fallthru
      _
    // Predicated region
    $region10: #{tpu_custom_call.1} parent=1 // pred_check
      _
    $region11: #{tpu_custom_call.1} parent=1 // pred_check_branch
      %25 = sbr.rel (0) target = $region13
    $region12: #{tpu_custom_call.1} parent=1 // pred_region
      _
    $region13: #{tpu_custom_call.1} parent=1 // pred_fallthru
      _
    // Predicated region
    $region14: #{tpu_custom_call.1} parent=1 // pred_check
      _
    $region15: #{tpu_custom_call.1} parent=1 // pred_check_branch
      %27 = sbr.rel (0) target = $region17
    $region16: #{tpu_custom_call.1} parent=1 // pred_region
      %28 = dma.done [#allocation3], 4096
    $region17: #{tpu_custom_call.1} parent=1 // pred_fallthru
      _
    %v29 = vld [vmem:[#allocation2] sm:$0xff]
    %v30 = vld [vmem:[#allocation2 + $0x8] sm:$0xff]
    %v31 = vld [vmem:[#allocation2 + $0x10] sm:$0xff]
    %v32 = vld [vmem:[#allocation2 + $0x18] sm:$0xff]
    %v33 = vld [vmem:[#allocation2 + $0x20] sm:$0xff]
    %v34 = vld [vmem:[#allocation2 + $0x28] sm:$0xff]
    %v35 = vld [vmem:[#allocation2 + $0x30] sm:$0xff]
    %v36 = vld [vmem:[#allocation2 + $0x38] sm:$0xff]
    %v37 = vld [vmem:[#allocation2 + $0x40] sm:$0xff]
    %v38 = vld [vmem:[#allocation2 + $0x48] sm:$0xff]
    %v39 = vld [vmem:[#allocation2 + $0x50] sm:$0xff]
    %v40 = vld [vmem:[#allocation2 + $0x58] sm:$0xff]
    %v41 = vld [vmem:[#allocation2 + $0x60] sm:$0xff]
    %v42 = vld [vmem:[#allocation2 + $0x68] sm:$0xff]
    %v43 = vld [vmem:[#allocation2 + $0x70] sm:$0xff]
    %v44 = vld [vmem:[#allocation2 + $0x78] sm:$0xff]
    %v45 = vld [vmem:[#allocation2 + $0x80] sm:$0xff]
    %v46 = vld [vmem:[#allocation2 + $0x88] sm:$0xff]
    %v47 = vld [vmem:[#allocation2 + $0x90] sm:$0xff]
    %v48 = vld [vmem:[#allocation2 + $0x98] sm:$0xff]
    %v49 = vld [vmem:[#allocation2 + $0xa0] sm:$0xff]
    %v50 = vld [vmem:[#allocation2 + $0xa8] sm:$0xff]
    %v51 = vld [vmem:[#allocation2 + $0xb0] sm:$0xff]
    %v52 = vld [vmem:[#allocation2 + $0xb8] sm:$0xff]
    %v53 = vld [vmem:[#allocation2 + $0xc0] sm:$0xff]
    %v54 = vld [vmem:[#allocation2 + $0xc8] sm:$0xff]
    %v55 = vld [vmem:[#allocation2 + $0xd0] sm:$0xff]
    %v56 = vld [vmem:[#allocation2 + $0xd8] sm:$0xff]
    %v57 = vld [vmem:[#allocation2 + $0xe0] sm:$0xff]
    %v58 = vld [vmem:[#allocation2 + $0xe8] sm:$0xff]
    %v59 = vld [vmem:[#allocation2 + $0xf0] sm:$0xff]
    %v60 = vld [vmem:[#allocation2 + $0xf8] sm:$0xff]
    %v61 = vadd.f32 %v29, %v33
    %v62 = vadd.f32 %v61, %v37
    %v63 = vadd.f32 %v62, %v41
    %v64 = vadd.f32 %v63, %v45
    %v65 = vadd.f32 %v64, %v49
    %v66 = vadd.f32 %v65, %v53
    %v67 = vadd.f32 %v66, %v57
    %v68 = vadd.f32 %v30, %v34
    %v69 = vadd.f32 %v68, %v38
    %v70 = vadd.f32 %v69, %v42
    %v71 = vadd.f32 %v70, %v46
    %v72 = vadd.f32 %v71, %v50
    %v73 = vadd.f32 %v72, %v54
    %v74 = vadd.f32 %v73, %v58
    %v75 = vadd.f32 %v31, %v35
    %v76 = vadd.f32 %v75, %v39
    %v77 = vadd.f32 %v76, %v43
    %v78 = vadd.f32 %v77, %v47
    %v79 = vadd.f32 %v78, %v51
    %v80 = vadd.f32 %v79, %v55
    %v81 = vadd.f32 %v80, %v59
    %v82 = vadd.f32 %v32, %v36
    %v83 = vadd.f32 %v82, %v40
    %v84 = vadd.f32 %v83, %v44
    %v85 = vadd.f32 %v84, %v48
    %v86 = vadd.f32 %v85, %v52
    %v87 = vadd.f32 %v86, %v56
    %v88 = vadd.f32 %v87, %v60
    %v89 = vmul.f32 %v29, %v29
    %v90 = vmul.f32 %v30, %v30
    %v91 = vmul.f32 %v31, %v31
    %v92 = vmul.f32 %v32, %v32
    %v93 = vmul.f32 %v33, %v33
    %v94 = vmul.f32 %v34, %v34
    %v95 = vmul.f32 %v35, %v35
    %v96 = vmul.f32 %v36, %v36
    %v97 = vmul.f32 %v37, %v37
    %v98 = vmul.f32 %v38, %v38
    %v99 = vmul.f32 %v39, %v39
    %v100 = vmul.f32 %v40, %v40
    %v101 = vmul.f32 %v41, %v41
    %v102 = vmul.f32 %v42, %v42
    %v103 = vmul.f32 %v43, %v43
    %v104 = vmul.f32 %v44, %v44
    %v105 = vmul.f32 %v45, %v45
    %v106 = vmul.f32 %v46, %v46
    %v107 = vmul.f32 %v47, %v47
    %v108 = vmul.f32 %v48, %v48
    %v109 = vmul.f32 %v49, %v49
    %v110 = vmul.f32 %v50, %v50
    %v111 = vmul.f32 %v51, %v51
    %v112 = vmul.f32 %v52, %v52
    %v113 = vmul.f32 %v53, %v53
    %v114 = vmul.f32 %v54, %v54
    %v115 = vmul.f32 %v55, %v55
    %v116 = vmul.f32 %v56, %v56
    %v117 = vmul.f32 %v57, %v57
    %v118 = vmul.f32 %v58, %v58
    %v119 = vmul.f32 %v59, %v59
    %v120 = vmul.f32 %v60, %v60
    %v121 = vadd.f32 %v89, %v93
    %v122 = vadd.f32 %v121, %v97
    %v123 = vadd.f32 %v122, %v101
    %v124 = vadd.f32 %v123, %v105
    %v125 = vadd.f32 %v124, %v109
    %v126 = vadd.f32 %v125, %v113
    %v127 = vadd.f32 %v126, %v117
    %v128 = vadd.f32 %v90, %v94
    %v129 = vadd.f32 %v128, %v98
    %v130 = vadd.f32 %v129, %v102
    %v131 = vadd.f32 %v130, %v106
    %v132 = vadd.f32 %v131, %v110
    %v133 = vadd.f32 %v132, %v114
    %v134 = vadd.f32 %v133, %v118
    %v135 = vadd.f32 %v91, %v95
    %v136 = vadd.f32 %v135, %v99
    %v137 = vadd.f32 %v136, %v103
    %v138 = vadd.f32 %v137, %v107
    %v139 = vadd.f32 %v138, %v111
    %v140 = vadd.f32 %v139, %v115
    %v141 = vadd.f32 %v140, %v119
    %v142 = vadd.f32 %v92, %v96
    %v143 = vadd.f32 %v142, %v100
    %v144 = vadd.f32 %v143, %v104
    %v145 = vadd.f32 %v144, %v108
    %v146 = vadd.f32 %v145, %v112
    %v147 = vadd.f32 %v146, %v116
    %v148 = vadd.f32 %v147, %v120
    %v149 = vadd.f32 %v67, %v74
    %150 = vadd.xlane.f32.xlu0 %v149
    %v151 = vpop.xlane.xlu0 %150
    %v152 = vadd.f32 %v81, %v88
    %153 = vadd.xlane.f32.xlu0 %v152
    %v154 = vpop.xlane.xlu0 %153
    %v155 = vadd.f32 %v127, %v134
    %156 = vadd.xlane.f32.xlu0 %v155
    %v157 = vpop.xlane.xlu0 %156
    %v158 = vadd.f32 %v141, %v148
    %159 = vadd.xlane.f32.xlu0 %v158
    %v160 = vpop.xlane.xlu0 %159
    %v161 = vmul.f32 %v151, 0.00048828125
    %v162 = vmul.f32 %v154, 0.00048828125
    %v163 = vmul.f32 %v157, 0.00048828125
    %v164 = vmul.f32 %v160, 0.00048828125
    %v165 = vmul.f32 %v161, %v161
    %v166 = vmul.f32 %v162, %v162
    %v167 = vsub.f32 %v163, %v165
    %v168 = vsub.f32 %v164, %v166
    %v169 = vmax.f32 %v167, 0.0
    %v170 = vmax.f32 %v168, 0.0
    %v171 = vadd.f32 %v169, 1e-05
    %v172 = vadd.f32 %v170, 1e-05
    %v173 = vrsqrt.pop %v171
    %v174 = vrsqrt.pop %v172
    %v175 = vld [vmem:[%s1] sm:$0xff]
    %v176 = vld [vmem:[%s1 + $0x8] sm:$0xff]
    %v177 = vmul.f32 %v175, %v173
    %v178 = vmul.f32 %v176, %v174
    %v179 = vld [vmem:[%s2] sm:$0xff]
    %v180 = vld [vmem:[%s2 + $0x8] sm:$0xff]
    %v181 = vmul.f32 %v161, %v177
    %v182 = vmul.f32 %v162, %v178
    %v183 = vsub.f32 %v179, %v181
    %v184 = vsub.f32 %v180, %v182
    %186 = vset.pattern.permute.xlu0 0
    %187 = vperm.xlu0 %186, %v177
    %v188 = vpop.permute.xlu0 %187
    %191 = vset.pattern.permute.xlu0 0
    %192 = vperm.xlu0 %191, %v178
    %v193 = vpop.permute.xlu0 %192
    %v195 = vmul.f32 %v29, %v188
    %v196 = vmul.f32 %v30, %v188
    %v197 = vmul.f32 %v31, %v193
    %v198 = vmul.f32 %v32, %v193
    %v199 = vmul.f32 %v33, %v188
    %v200 = vmul.f32 %v34, %v188
    %v201 = vmul.f32 %v35, %v193
    %v202 = vmul.f32 %v36, %v193
    %v203 = vmul.f32 %v37, %v188
    %v204 = vmul.f32 %v38, %v188
    %v205 = vmul.f32 %v39, %v193
    %v206 = vmul.f32 %v40, %v193
    %v207 = vmul.f32 %v41, %v188
    %v208 = vmul.f32 %v42, %v188
    %v209 = vmul.f32 %v43, %v193
    %v210 = vmul.f32 %v44, %v193
    %v211 = vmul.f32 %v45, %v188
    %v212 = vmul.f32 %v46, %v188
    %v213 = vmul.f32 %v47, %v193
    %v214 = vmul.f32 %v48, %v193
    %v215 = vmul.f32 %v49, %v188
    %v216 = vmul.f32 %v50, %v188
    %v217 = vmul.f32 %v51, %v193
    %v218 = vmul.f32 %v52, %v193
    %v219 = vmul.f32 %v53, %v188
    %v220 = vmul.f32 %v54, %v188
    %v221 = vmul.f32 %v55, %v193
    %v222 = vmul.f32 %v56, %v193
    %v223 = vmul.f32 %v57, %v188
    %v224 = vmul.f32 %v58, %v188
    %v225 = vmul.f32 %v59, %v193
    %v226 = vmul.f32 %v60, %v193
    %228 = vset.pattern.permute.xlu0 0
    %229 = vperm.xlu0 %228, %v183
    %v230 = vpop.permute.xlu0 %229
    %233 = vset.pattern.permute.xlu0 0
    %234 = vperm.xlu0 %233, %v184
    %v235 = vpop.permute.xlu0 %234
    %v237 = vadd.f32 %v195, %v230
    %v238 = vadd.f32 %v196, %v230
    %v239 = vadd.f32 %v197, %v235
    %v240 = vadd.f32 %v198, %v235
    %v241 = vadd.f32 %v199, %v230
    %v242 = vadd.f32 %v200, %v230
    %v243 = vadd.f32 %v201, %v235
    %v244 = vadd.f32 %v202, %v235
    %v245 = vadd.f32 %v203, %v230
    %v246 = vadd.f32 %v204, %v230
    %v247 = vadd.f32 %v205, %v235
    %v248 = vadd.f32 %v206, %v235
    %v249 = vadd.f32 %v207, %v230
    %v250 = vadd.f32 %v208, %v230
    %v251 = vadd.f32 %v209, %v235
    %v252 = vadd.f32 %v210, %v235
    %v253 = vadd.f32 %v211, %v230
    %v254 = vadd.f32 %v212, %v230
    %v255 = vadd.f32 %v213, %v235
    %v256 = vadd.f32 %v214, %v235
    %v257 = vadd.f32 %v215, %v230
    %v258 = vadd.f32 %v216, %v230
    %v259 = vadd.f32 %v217, %v235
    %v260 = vadd.f32 %v218, %v235
    %v261 = vadd.f32 %v219, %v230
    %v262 = vadd.f32 %v220, %v230
    %v263 = vadd.f32 %v221, %v235
    %v264 = vadd.f32 %v222, %v235
    %v265 = vadd.f32 %v223, %v230
    %v266 = vadd.f32 %v224, %v230
    %v267 = vadd.f32 %v225, %v235
    %v268 = vadd.f32 %v226, %v235
    %269 = vst [vmem:[#allocation5] sm:$0xff] %v237
    %270 = vst [vmem:[#allocation5 + $0x8] sm:$0xff] %v238
    %271 = vst [vmem:[#allocation5 + $0x10] sm:$0xff] %v239
    %272 = vst [vmem:[#allocation5 + $0x18] sm:$0xff] %v240
    %273 = vst [vmem:[#allocation5 + $0x20] sm:$0xff] %v241
    %274 = vst [vmem:[#allocation5 + $0x28] sm:$0xff] %v242
    %275 = vst [vmem:[#allocation5 + $0x30] sm:$0xff] %v243
    %276 = vst [vmem:[#allocation5 + $0x38] sm:$0xff] %v244
    %277 = vst [vmem:[#allocation5 + $0x40] sm:$0xff] %v245
    %278 = vst [vmem:[#allocation5 + $0x48] sm:$0xff] %v246
    %279 = vst [vmem:[#allocation5 + $0x50] sm:$0xff] %v247
    %280 = vst [vmem:[#allocation5 + $0x58] sm:$0xff] %v248
    %281 = vst [vmem:[#allocation5 + $0x60] sm:$0xff] %v249
    %282 = vst [vmem:[#allocation5 + $0x68] sm:$0xff] %v250
    %283 = vst [vmem:[#allocation5 + $0x70] sm:$0xff] %v251
    %284 = vst [vmem:[#allocation5 + $0x78] sm:$0xff] %v252
    %285 = vst [vmem:[#allocation5 + $0x80] sm:$0xff] %v253
    %286 = vst [vmem:[#allocation5 + $0x88] sm:$0xff] %v254
    %287 = vst [vmem:[#allocation5 + $0x90] sm:$0xff] %v255
    %288 = vst [vmem:[#allocation5 + $0x98] sm:$0xff] %v256
    %289 = vst [vmem:[#allocation5 + $0xa0] sm:$0xff] %v257
    %290 = vst [vmem:[#allocation5 + $0xa8] sm:$0xff] %v258
    %291 = vst [vmem:[#allocation5 + $0xb0] sm:$0xff] %v259
    %292 = vst [vmem:[#allocation5 + $0xb8] sm:$0xff] %v260
    %293 = vst [vmem:[#allocation5 + $0xc0] sm:$0xff] %v261
    %294 = vst [vmem:[#allocation5 + $0xc8] sm:$0xff] %v262
    %295 = vst [vmem:[#allocation5 + $0xd0] sm:$0xff] %v263
    %296 = vst [vmem:[#allocation5 + $0xd8] sm:$0xff] %v264
    %297 = vst [vmem:[#allocation5 + $0xe0] sm:$0xff] %v265
    %298 = vst [vmem:[#allocation5 + $0xe8] sm:$0xff] %v266
    %299 = vst [vmem:[#allocation5 + $0xf0] sm:$0xff] %v267
    %300 = vst [vmem:[#allocation5 + $0xf8] sm:$0xff] %v268
    // Predicated region
    $region18: #{tpu_custom_call.1} parent=1 // pred_check
      _
    $region19: #{tpu_custom_call.1} parent=1 // pred_check_branch
      %302 = sbr.rel (0) target = $region21
    $region20: #{tpu_custom_call.1} parent=1 // pred_region
      %s304 = ssub.s32 4096, 4096
      %305 = vsyncadd [#allocation4], %s304
      %s306 = sshll.u32 [#allocation5], 4
      %s307 = int_to_ptr.vmem [resolvable:$true] %s306
      %312 = dma.vmem_to_hbm [thread:$0]  %s307, 4096, %s3, [#allocation4], 256, 256, 16
    $region21: #{tpu_custom_call.1} parent=1 // pred_fallthru
      _
    // Predicated region
    $region22: #{tpu_custom_call.1} parent=1 // pred_check
      _
    $region23: #{tpu_custom_call.1} parent=1 // pred_check_branch
      %314 = sbr.rel (0) target = $region25
    $region24: #{tpu_custom_call.1} parent=1 // pred_region
      %315 = dma.done [#allocation4], 4096
    $region25: #{tpu_custom_call.1} parent=1 // pred_fallthru
      _
    %316 = vsyncpa [#allocation3], 1
    %317 = vsyncpa [#allocation4], 1

</llo_original>
